<compile_context>
chip_gen: v7x
topology: tpu7x:2x2x1
jax: 0.10.0
libtpu: 0.0.40
codegen_flags: <defaults>
</compile_context>

<pallas_src>
import functools

import jax
import jax.numpy as jnp
from jax.experimental import pallas as pl
from jax.experimental.pallas import tpu as pltpu


def _dqn_dense_kernel(x_ref, w0_ref, b0_ref, w1_ref, b1_ref, w2_ref, b2_ref,
                      q_ref):
    # Layer 0: DQN.input Linear(obs_dim, 128) + ReLU. bf16 operands, f32 acc.
    h = jnp.dot(x_ref[...], w0_ref[...], preferred_element_type=jnp.float32)
    h = jnp.maximum(h + b0_ref[...], 0.0)
    # Layer 1: fc1 Linear(128, hidden) + ReLU.
    h = jnp.dot(h.astype(jnp.bfloat16), w1_ref[...],
                preferred_element_type=jnp.float32)
    h = jnp.maximum(h + b1_ref[...], 0.0)
    # Layer 2: fc2 Linear(hidden, action_pad), no ReLU. Lane-dense store.
    q = jnp.dot(h.astype(jnp.bfloat16), w2_ref[...],
                preferred_element_type=jnp.float32)
    q_ref[...] = (q + b2_ref[...]).astype(q_ref.dtype)


def _round_up(x, m):
    return (x + m - 1) // m * m


@functools.partial(jax.jit, static_argnames=("tb",))
def dqn_dense_forward(x, w0, b0, w1, b1, w2, b2, *, tb=256):
    """x: [B, obs_dim]; wK: [in, out]; bK: [1, out]. Returns q: [B, action]."""
    batch, obs_dim = x.shape
    feat = w0.shape[1]        # 128 (DQN dense feature width)
    hidden = w1.shape[1]
    action = w2.shape[1]

    # Lane-dense output: zero-pad the action dim to a multiple of 128 so the
    # final store is a full-lane (unmasked) vst; slice back after the call.
    action_pad = _round_up(action, 128)
    w2p = jnp.pad(w2, ((0, 0), (0, action_pad - action)))
    b2p = jnp.pad(b2, ((0, 0), (0, action_pad - action)))

    # Batch tile: multiple of 8 sublanes, capped at `tb`; pad the batch so
    # every grid step sees a full tile (padded rows are sliced off at the end).
    tb_eff = min(tb, _round_up(batch, 8))
    batch_pad = _round_up(batch, tb_eff)
    xp = jnp.pad(x, ((0, batch_pad - batch), (0, 0)))

    # bf16 storage for x and weights; biases / accumulation stay f32.
    xp = xp.astype(jnp.bfloat16)
    w0b = w0.astype(jnp.bfloat16)
    w1b = w1.astype(jnp.bfloat16)
    w2b = w2p.astype(jnp.bfloat16)

    resident = lambda i: (0, 0)   # weights/biases stay in VMEM across steps
    q_pad = pl.pallas_call(
        _dqn_dense_kernel,
        out_shape=jax.ShapeDtypeStruct((batch_pad, action_pad), jnp.float32),
        grid=(batch_pad // tb_eff,),
        in_specs=[
            pl.BlockSpec((tb_eff, obs_dim), lambda i: (i, 0)),   # x tile
            pl.BlockSpec((obs_dim, feat), resident),             # w0
            pl.BlockSpec((1, feat), resident),                   # b0
            pl.BlockSpec((feat, hidden), resident),              # w1
            pl.BlockSpec((1, hidden), resident),                 # b1
            pl.BlockSpec((hidden, action_pad), resident),        # w2 (padded)
            pl.BlockSpec((1, action_pad), resident),             # b2 (padded)
        ],
        out_specs=pl.BlockSpec((tb_eff, action_pad), lambda i: (i, 0)),
        compiler_params=pltpu.CompilerParams(
            dimension_semantics=("parallel",)),   # shard batch over v7x's 2 TCs
    )(xp, w0b, b0, w1b, b1, w2b, b2p)
    return q_pad[:batch, :action]


def _init_linear(key, fan_in, fan_out):
    """Deterministic PyTorch-style nn.Linear init (uniform +/- 1/sqrt(fan_in)).

    Returns W transposed to [fan_in, fan_out] and bias as [1, fan_out].
    """
    kw, kb = jax.random.split(key)
    bound = 1.0 / jnp.sqrt(jnp.float32(fan_in))
    w = jax.random.uniform(kw, (fan_in, fan_out), jnp.float32, -bound, bound)
    b = jax.random.uniform(kb, (1, fan_out), jnp.float32, -bound, bound)
    return w, b


def reference_forward(x, w0, b0, w1, b1, w2, b2):
    h = jnp.maximum(x @ w0 + b0, 0.0)
    h = jnp.maximum(h @ w1 + b1, 0.0)
    return h @ w2 + b2


if __name__ == "__main__":
    # observation_size = (16,) -> dense branch; hidden_units=32; action_size=4
    batch = 2
    obs_dim = 16
    feature_size = 128      # DQN dense feature layer width (n = 128)
    hidden_units = 32
    action_size = 4

    key = jax.random.PRNGKey(0)
    k_x, k0, k1, k2 = jax.random.split(key, 4)

    x = jax.random.normal(k_x, (batch, obs_dim), jnp.float32)
    w0, b0 = _init_linear(k0, obs_dim, feature_size)        # self.input
    w1, b1 = _init_linear(k1, feature_size, hidden_units)   # self.fc1
    w2, b2 = _init_linear(k2, hidden_units, action_size)    # self.fc2
    # TODO(synk): NoisyLinear (noisy=True) sample_noise path not implemented;
    # this reproduces the noisy=False (plain nn.Linear) forward.

    q = dqn_dense_forward(x, w0, b0, w1, b1, w2, b2)
    q = jax.block_until_ready(q)

    q_ref = reference_forward(x, w0, b0, w1, b1, w2, b2)
    assert q.shape == (batch, action_size)
    # bf16 weight/activation storage in the kernel -> compare with a loose
    # tolerance against the pure-f32 reference.
    assert jnp.allclose(q, q_ref, atol=3e-2, rtol=3e-2)

    print("KERNEL_OK")
</pallas_src>

<mosaic_0001>
module attributes {stable_mosaic.version = 11 : i64} {
  func.func @_dqn_dense_kernel(%arg0: i32, %arg1: memref<8x16xbf16, #tpu.memory_space<vmem>>, %arg2: memref<16x128xbf16, #tpu.memory_space<vmem>>, %arg3: memref<1x128xf32, #tpu.memory_space<vmem>>, %arg4: memref<128x32xbf16, #tpu.memory_space<vmem>>, %arg5: memref<1x32xf32, #tpu.memory_space<vmem>>, %arg6: memref<32x128xbf16, #tpu.memory_space<vmem>>, %arg7: memref<1x128xf32, #tpu.memory_space<vmem>>, %arg8: memref<8x128xf32, #tpu.memory_space<vmem>>) attributes {dimension_semantics = [#tpu.dimension_semantics<parallel>], iteration_bounds = array<i64: 1>, scalar_prefetch = 0 : i64, scratch_operands = 0 : i64, tpu.core_type = #tpu.core_type<tc>, window_params = [{transform_indices = @transform_0, window_bounds = array<i64: 8, 16>}, {pipeline_mode = #tpu.pipeline_mode<synchronous>, transform_indices = @transform_1, window_bounds = array<i64: 16, 128>}, {pipeline_mode = #tpu.pipeline_mode<synchronous>, transform_indices = @transform_2, window_bounds = array<i64: 1, 128>}, {pipeline_mode = #tpu.pipeline_mode<synchronous>, transform_indices = @transform_3, window_bounds = array<i64: 128, 32>}, {pipeline_mode = #tpu.pipeline_mode<synchronous>, transform_indices = @transform_4, window_bounds = array<i64: 1, 32>}, {pipeline_mode = #tpu.pipeline_mode<synchronous>, transform_indices = @transform_5, window_bounds = array<i64: 32, 128>}, {pipeline_mode = #tpu.pipeline_mode<synchronous>, transform_indices = @transform_6, window_bounds = array<i64: 1, 128>}, {transform_indices = @transform_7, window_bounds = array<i64: 8, 128>}]} {
    %c0 = arith.constant 0 : index
    %c0_0 = arith.constant 0 : index
    %0 = vector.load %arg1[%c0, %c0_0] : memref<8x16xbf16, #tpu.memory_space<vmem>>, vector<8x16xbf16>
    %c0_1 = arith.constant 0 : index
    %c0_2 = arith.constant 0 : index
    %1 = vector.load %arg2[%c0_1, %c0_2] : memref<16x128xbf16, #tpu.memory_space<vmem>>, vector<16x128xbf16>
    %cst = arith.constant dense<0.000000e+00> : vector<8x128xf32>
    %2 = tpu.matmul %0, %1, %cst {dimension_numbers = #tpu.dot_dimension_numbers<[1], [0], [0], [1], [0, 0, 1, 1], [], []>} : vector<8x16xbf16>, vector<16x128xbf16>, vector<8x128xf32> -> vector<8x128xf32>
    %c0_3 = arith.constant 0 : index
    %c0_4 = arith.constant 0 : index
    %3 = vector.load %arg3[%c0_3, %c0_4] : memref<1x128xf32, #tpu.memory_space<vmem>>, vector<1x128xf32>
    %4 = vector.broadcast %3 : vector<1x128xf32> to vector<8x128xf32>
    %5 = arith.addf %2, %4 : vector<8x128xf32>
    %cst_5 = arith.constant 0.000000e+00 : f32
    %6 = vector.broadcast %cst_5 : f32 to vector<8x128xf32>
    %7 = arith.maximumf %5, %6 : vector<8x128xf32>
    %8 = arith.truncf %7 : vector<8x128xf32> to vector<8x128xbf16>
    %c0_6 = arith.constant 0 : index
    %c0_7 = arith.constant 0 : index
    %9 = vector.load %arg4[%c0_6, %c0_7] : memref<128x32xbf16, #tpu.memory_space<vmem>>, vector<128x32xbf16>
    %cst_8 = arith.constant dense<0.000000e+00> : vector<8x32xf32>
    %10 = tpu.matmul %8, %9, %cst_8 {dimension_numbers = #tpu.dot_dimension_numbers<[1], [0], [0], [1], [0, 0, 1, 1], [], []>} : vector<8x128xbf16>, vector<128x32xbf16>, vector<8x32xf32> -> vector<8x32xf32>
    %c0_9 = arith.constant 0 : index
    %c0_10 = arith.constant 0 : index
    %11 = vector.load %arg5[%c0_9, %c0_10] : memref<1x32xf32, #tpu.memory_space<vmem>>, vector<1x32xf32>
    %12 = vector.broadcast %11 : vector<1x32xf32> to vector<8x32xf32>
    %13 = arith.addf %10, %12 : vector<8x32xf32>
    %cst_11 = arith.constant 0.000000e+00 : f32
    %14 = vector.broadcast %cst_11 : f32 to vector<8x32xf32>
    %15 = arith.maximumf %13, %14 : vector<8x32xf32>
    %16 = arith.truncf %15 : vector<8x32xf32> to vector<8x32xbf16>
    %c0_12 = arith.constant 0 : index
    %c0_13 = arith.constant 0 : index
    %17 = vector.load %arg6[%c0_12, %c0_13] : memref<32x128xbf16, #tpu.memory_space<vmem>>, vector<32x128xbf16>
    %cst_14 = arith.constant dense<0.000000e+00> : vector<8x128xf32>
    %18 = tpu.matmul %16, %17, %cst_14 {dimension_numbers = #tpu.dot_dimension_numbers<[1], [0], [0], [1], [0, 0, 1, 1], [], []>} : vector<8x32xbf16>, vector<32x128xbf16>, vector<8x128xf32> -> vector<8x128xf32>
    %c0_15 = arith.constant 0 : index
    %c0_16 = arith.constant 0 : index
    %19 = vector.load %arg7[%c0_15, %c0_16] : memref<1x128xf32, #tpu.memory_space<vmem>>, vector<1x128xf32>
    %20 = vector.broadcast %19 : vector<1x128xf32> to vector<8x128xf32>
    %21 = arith.addf %18, %20 : vector<8x128xf32>
    %c0_17 = arith.constant 0 : index
    %c0_18 = arith.constant 0 : index
    %22 = vector.load %arg8[%c0_17, %c0_18] : memref<8x128xf32, #tpu.memory_space<vmem>>, vector<8x128xf32>
    tpu.vector_store %arg8[%c0_17, %c0_18], %21 {strides = array<i32>} : memref<8x128xf32, #tpu.memory_space<vmem>>, vector<8x128xf32>,
    return
  }
  func.func @transform_0(%arg0: i32) -> (i32, i32) {
    %c0_i32 = arith.constant 0 : i32
    %c0_i32_0 = arith.constant 0 : i32
    return %arg0, %c0_i32 : i32, i32
  }
  func.func @transform_1(%arg0: i32) -> (i32, i32) {
    %c0_i32 = arith.constant 0 : i32
    %c0_i32_0 = arith.constant 0 : i32
    %c0_i32_1 = arith.constant 0 : i32
    return %c0_i32, %c0_i32_0 : i32, i32
  }
  func.func @transform_2(%arg0: i32) -> (i32, i32) {
    %c0_i32 = arith.constant 0 : i32
    %c0_i32_0 = arith.constant 0 : i32
    %c0_i32_1 = arith.constant 0 : i32
    return %c0_i32, %c0_i32_0 : i32, i32
  }
  func.func @transform_3(%arg0: i32) -> (i32, i32) {
    %c0_i32 = arith.constant 0 : i32
    %c0_i32_0 = arith.constant 0 : i32
    %c0_i32_1 = arith.constant 0 : i32
    return %c0_i32, %c0_i32_0 : i32, i32
  }
  func.func @transform_4(%arg0: i32) -> (i32, i32) {
    %c0_i32 = arith.constant 0 : i32
    %c0_i32_0 = arith.constant 0 : i32
    %c0_i32_1 = arith.constant 0 : i32
    return %c0_i32, %c0_i32_0 : i32, i32
  }
  func.func @transform_5(%arg0: i32) -> (i32, i32) {
    %c0_i32 = arith.constant 0 : i32
    %c0_i32_0 = arith.constant 0 : i32
    %c0_i32_1 = arith.constant 0 : i32
    return %c0_i32, %c0_i32_0 : i32, i32
  }
  func.func @transform_6(%arg0: i32) -> (i32, i32) {
    %c0_i32 = arith.constant 0 : i32
    %c0_i32_0 = arith.constant 0 : i32
    %c0_i32_1 = arith.constant 0 : i32
    return %c0_i32, %c0_i32_0 : i32, i32
  }
  func.func @transform_7(%arg0: i32) -> (i32, i32) {
    %c0_i32 = arith.constant 0 : i32
    %c0_i32_0 = arith.constant 0 : i32
    return %arg0, %c0_i32 : i32, i32
  }
}

</mosaic_0001>

<llo_original>
// kernel: dqn_dense_forward.1
$region0: #{dqn_dense_forward.1}
  #allocation0 [shape = 'u32[]', space=smem, size = 0x4, offset = 0x4, fixed_abs, tag = 'smem constant byte address 0x4 - core index']
  #allocation1 [shape = 'u32[144,128]{1,0:T(1,128)}', space=vmem, size = 0x12000, scoped, tag = 'internal scratch']
  %s0 = inlined_call_operand.vmem [shape: bf16[8,16], index: 0, kind: input, shape index: {}]
  %s1 = inlined_call_operand.vmem [shape: bf16[16,128], index: 1, kind: input, shape index: {}]
  %s2 = inlined_call_operand.vmem [shape: f32[1,128], index: 2, kind: input, shape index: {}]
  %s3 = inlined_call_operand.vmem [shape: bf16[128,32], index: 3, kind: input, shape index: {}]
  %s4 = inlined_call_operand.vmem [shape: f32[1,32], index: 4, kind: input, shape index: {}]
  %s5 = inlined_call_operand.vmem [shape: bf16[32,128], index: 5, kind: input, shape index: {}]
  %s6 = inlined_call_operand.vmem [shape: f32[1,128], index: 6, kind: input, shape index: {}]
  %s7 = inlined_call_operand.vmem [shape: f32[8,128], index: 7, kind: output, shape index: {}]
  %s8 = sld [smem:[#allocation0]]
  $region38: #{dqn_dense_forward.1} parent=0
    _
  %s10 = ssub.s32 1, %s8
  %s11 = scalar_select 0, %s10, %s8
  // Predicated region
  $region2: #{dqn_dense_forward.1} parent=0 // pred_check
    _
  $region3: #{dqn_dense_forward.1} parent=0 // pred_check_branch
    %13 = sbr.rel (0) target = $region5
  $region4: #{dqn_dense_forward.1} parent=0 // pred_region
    _
  $region5: #{dqn_dense_forward.1} parent=0 // pred_fallthru
    _
  // Predicated region
  $region6: #{dqn_dense_forward.1} parent=0 // pred_check
    _
  $region7: #{dqn_dense_forward.1} parent=0 // pred_check_branch
    %15 = sbr.rel (0) target = $region9
  $region8: #{dqn_dense_forward.1} parent=0 // pred_region
    _
  $region9: #{dqn_dense_forward.1} parent=0 // pred_fallthru
    _
  // Predicated region
  $region10: #{dqn_dense_forward.1} parent=0 // pred_check
    _
  $region11: #{dqn_dense_forward.1} parent=0 // pred_check_branch
    %17 = sbr.rel (0) target = $region13
  $region12: #{dqn_dense_forward.1} parent=0 // pred_region
    _
  $region13: #{dqn_dense_forward.1} parent=0 // pred_fallthru
    _
  // Predicated region
  $region14: #{dqn_dense_forward.1} parent=0 // pred_check
    _
  $region15: #{dqn_dense_forward.1} parent=0 // pred_check_branch
    %19 = sbr.rel (0) target = $region17
  $region16: #{dqn_dense_forward.1} parent=0 // pred_region
    _
  $region17: #{dqn_dense_forward.1} parent=0 // pred_fallthru
    _
  // Predicated region
  $region18: #{dqn_dense_forward.1} parent=0 // pred_check
    _
  $region19: #{dqn_dense_forward.1} parent=0 // pred_check_branch
    %21 = sbr.rel (0) target = $region21
  $region20: #{dqn_dense_forward.1} parent=0 // pred_region
    _
  $region21: #{dqn_dense_forward.1} parent=0 // pred_fallthru
    _
  // Predicated region
  $region22: #{dqn_dense_forward.1} parent=0 // pred_check
    _
  $region23: #{dqn_dense_forward.1} parent=0 // pred_check_branch
    %23 = sbr.rel (0) target = $region25
  $region24: #{dqn_dense_forward.1} parent=0 // pred_region
    _
  $region25: #{dqn_dense_forward.1} parent=0 // pred_fallthru
    _
  // Predicated region
  $region26: #{dqn_dense_forward.1} parent=0 // pred_check
    _
  $region27: #{dqn_dense_forward.1} parent=0 // pred_check_branch
    %25 = sbr.rel (0) target = $region29
  $region28: #{dqn_dense_forward.1} parent=0 // pred_region
    _
  $region29: #{dqn_dense_forward.1} parent=0 // pred_fallthru
    _
  %v27 = vld [vmem:[%s0] sm:$0xf]
  %v28 = vld [vmem:[%s1] sm:$0xf]
  %v29 = vld [vmem:[%s1 + $0x4] sm:$0xf]
  %v30 = vld [vmem:[%s2] sm:$0x1]
  %v32 = vlaneseq
  %v33 = vshrl.u32 %v32, 7
  %v34 = vsub.s32 0, %v33
  %v35 = vrot.slane %v30, %v34
  %v39 = vunpack.c.l.b16 %v28
  %v40 = vunpack.c.l.b16 %v29
  %v41 = vpack.c.b16 %v40, %v39
  %vm43 = vcmask 130048
  %v45 = vsel %vm43, %v27, 0
  %47 = vmatprep.subr.bf16.mxu0 0
  %48 = vmatpush1.bf16.msra.mxu0 %v41
  %49 = vmatprep.subr.bf16.mxu0 0
  %50 = vmatpush1.bf16.msra.mxu0 0
  %51 = vmatprep.subr.bf16.mxu0 0
  %52 = vmatpush1.bf16.msra.mxu0 0
  %53 = vmatprep.subr.bf16.mxu0 0
  %54 = vmatpush1.bf16.msra.mxu0 0
  %55 = vmatprep.subr.bf16.mxu0 0
  %56 = vmatpush1.bf16.msra.mxu0 0
  %57 = vmatprep.subr.bf16.mxu0 0
  %58 = vmatpush1.bf16.msra.mxu0 0
  %59 = vmatprep.subr.bf16.mxu0 0
  %60 = vmatpush1.bf16.msra.mxu0 0
  %61 = vmatprep.subr.bf16.mxu0 0
  %62 = vmatpush1.bf16.msra.mxu0 0
  %63 = vmatprep.subr.bf16.mxu0 0
  %64 = vmatpush1.bf16.msra.mxu0 0
  %65 = vmatprep.subr.bf16.mxu0 0
  %66 = vmatpush1.bf16.msra.mxu0 0
  %67 = vmatprep.subr.bf16.mxu0 0
  %68 = vmatpush1.bf16.msra.mxu0 0
  %69 = vmatprep.subr.bf16.mxu0 0
  %70 = vmatpush1.bf16.msra.mxu0 0
  %71 = vmatprep.subr.bf16.mxu0 0
  %72 = vmatpush1.bf16.msra.mxu0 0
  %73 = vmatprep.subr.bf16.mxu0 0
  %74 = vmatpush1.bf16.msra.mxu0 0
  %75 = vmatprep.subr.bf16.mxu0 0
  %76 = vmatpush1.bf16.msra.mxu0 0
  %77 = vmatprep.subr.bf16.mxu0 0
  %78 = vmatpush1.bf16.msra.mxu0 0
  %79 = vmatprep.mubr.bf16.mxu0 0
  %80 = vmatmul.mubr.bf16.gmra.mrb[0].mxu0 %v45
  %v81 = vpop.f32.mrb[0].mxu0
  %v82 = vadd.f32 %v35, %v81
  %v83 = vpop.f32.mrb[0].mxu0
  %v84 = vpop.f32.mrb[0].mxu0
  %v85 = vpop.f32.mrb[0].mxu0
  %86 = vdwg.mxu0
  %v87 = vmax.f32 %v82, 0.0
  %v88 = vpack.c.bf16 %v87, %v87
  %v89 = vld [vmem:[%s3] sm:$0xf]
  %v90 = vld [vmem:[%s3 + $0x4] sm:$0xf]
  %v91 = vld [vmem:[%s3 + $0x8] sm:$0xf]
  %v92 = vld [vmem:[%s3 + $0xc] sm:$0xf]
  %v93 = vld [vmem:[%s3 + $0x10] sm:$0xf]
  %v94 = vld [vmem:[%s3 + $0x14] sm:$0xf]
  %v95 = vld [vmem:[%s3 + $0x18] sm:$0xf]
  %v96 = vld [vmem:[%s3 + $0x1c] sm:$0xf]
  %v97 = vld [vmem:[%s3 + $0x20] sm:$0xf]
  %v98 = vld [vmem:[%s3 + $0x24] sm:$0xf]
  %v99 = vld [vmem:[%s3 + $0x28] sm:$0xf]
  %v100 = vld [vmem:[%s3 + $0x2c] sm:$0xf]
  %v101 = vld [vmem:[%s3 + $0x30] sm:$0xf]
  %v102 = vld [vmem:[%s3 + $0x34] sm:$0xf]
  %v103 = vld [vmem:[%s3 + $0x38] sm:$0xf]
  %v104 = vld [vmem:[%s3 + $0x3c] sm:$0xf]
  %v105 = vld [vmem:[%s4] sm:$0x1]
  %v107 = vlaneseq
  %v108 = vshrl.u32 %v107, 7
  %v109 = vsub.s32 0, %v108
  %v110 = vrot.slane %v105, %v109
  %v128 = vunpack.c.l.b16 %v89
  %v129 = vunpack.c.l.b16 %v90
  %v130 = vunpack.c.l.b16 %v91
  %v131 = vunpack.c.l.b16 %v92
  %v132 = vunpack.c.l.b16 %v93
  %v133 = vunpack.c.l.b16 %v94
  %v134 = vunpack.c.l.b16 %v95
  %v135 = vunpack.c.l.b16 %v96
  %v136 = vunpack.c.l.b16 %v97
  %v137 = vunpack.c.l.b16 %v98
  %v138 = vunpack.c.l.b16 %v99
  %v139 = vunpack.c.l.b16 %v100
  %v140 = vunpack.c.l.b16 %v101
  %v141 = vunpack.c.l.b16 %v102
  %v142 = vunpack.c.l.b16 %v103
  %v143 = vunpack.c.l.b16 %v104
  %v144 = vpack.c.b16 %v129, %v128
  %v145 = vpack.c.b16 %v131, %v130
  %v146 = vpack.c.b16 %v133, %v132
  %v147 = vpack.c.b16 %v135, %v134
  %v148 = vpack.c.b16 %v137, %v136
  %v149 = vpack.c.b16 %v139, %v138
  %v150 = vpack.c.b16 %v141, %v140
  %v151 = vpack.c.b16 %v143, %v142
  %160 = vmatprep.subr.bf16.mxu0 0
  %161 = vmatpush1.bf16.msra.mxu0 %v144
  %162 = vmatprep.subr.bf16.mxu0 0
  %163 = vmatpush1.bf16.msra.mxu0 %v145
  %164 = vmatprep.subr.bf16.mxu0 0
  %165 = vmatpush1.bf16.msra.mxu0 %v146
  %166 = vmatprep.subr.bf16.mxu0 0
  %167 = vmatpush1.bf16.msra.mxu0 %v147
  %168 = vmatprep.subr.bf16.mxu0 0
  %169 = vmatpush1.bf16.msra.mxu0 %v148
  %170 = vmatprep.subr.bf16.mxu0 0
  %171 = vmatpush1.bf16.msra.mxu0 %v149
  %172 = vmatprep.subr.bf16.mxu0 0
  %173 = vmatpush1.bf16.msra.mxu0 %v150
  %174 = vmatprep.subr.bf16.mxu0 0
  %175 = vmatpush1.bf16.msra.mxu0 %v151
  %176 = vmatprep.subr.bf16.mxu0 0
  %177 = vmatpush1.bf16.msra.mxu0 0
  %178 = vmatprep.subr.bf16.mxu0 0
  %179 = vmatpush1.bf16.msra.mxu0 0
  %180 = vmatprep.subr.bf16.mxu0 0
  %181 = vmatpush1.bf16.msra.mxu0 0
  %182 = vmatprep.subr.bf16.mxu0 0
  %183 = vmatpush1.bf16.msra.mxu0 0
  %184 = vmatprep.subr.bf16.mxu0 0
  %185 = vmatpush1.bf16.msra.mxu0 0
  %186 = vmatprep.subr.bf16.mxu0 0
  %187 = vmatpush1.bf16.msra.mxu0 0
  %188 = vmatprep.subr.bf16.mxu0 0
  %189 = vmatpush1.bf16.msra.mxu0 0
  %190 = vmatprep.subr.bf16.mxu0 0
  %191 = vmatpush1.bf16.msra.mxu0 0
  %192 = vmatprep.mubr.bf16.mxu0 0
  %193 = vmatmul.mubr.bf16.gmra.mrb[0].mxu0 %v88
  %v194 = vpop.f32.mrb[0].mxu0
  %v195 = vadd.f32 %v110, %v194
  %v196 = vpop.f32.mrb[0].mxu0
  %v197 = vpop.f32.mrb[0].mxu0
  %v198 = vpop.f32.mrb[0].mxu0
  %199 = vdwg.mxu0
  %v200 = vmax.f32 %v195, 0.0
  %v201 = vpack.c.bf16 %v200, %v200
  %v202 = vld [vmem:[%s5] sm:$0xf]
  %v203 = vld [vmem:[%s5 + $0x4] sm:$0xf]
  %v204 = vld [vmem:[%s5 + $0x8] sm:$0xf]
  %v205 = vld [vmem:[%s5 + $0xc] sm:$0xf]
  %v206 = vld [vmem:[%s6] sm:$0x1]
  %v208 = vlaneseq
  %v209 = vshrl.u32 %v208, 7
  %v210 = vsub.s32 0, %v209
  %v211 = vrot.slane %v206, %v210
  %v217 = vunpack.c.l.b16 %v202
  %v218 = vunpack.c.l.b16 %v203
  %v219 = vunpack.c.l.b16 %v204
  %v220 = vunpack.c.l.b16 %v205
  %v221 = vpack.c.b16 %v218, %v217
  %v222 = vpack.c.b16 %v220, %v219
  %vm225 = vcmask 261120
  %v227 = vsel %vm225, %v201, 0
  %229 = vmatprep.subr.bf16.mxu0 0
  %230 = vmatpush1.bf16.msra.mxu0 %v221
  %231 = vmatprep.subr.bf16.mxu0 0
  %232 = vmatpush1.bf16.msra.mxu0 %v222
  %233 = vmatprep.subr.bf16.mxu0 0
  %234 = vmatpush1.bf16.msra.mxu0 0
  %235 = vmatprep.subr.bf16.mxu0 0
  %236 = vmatpush1.bf16.msra.mxu0 0
  %237 = vmatprep.subr.bf16.mxu0 0
  %238 = vmatpush1.bf16.msra.mxu0 0
  %239 = vmatprep.subr.bf16.mxu0 0
  %240 = vmatpush1.bf16.msra.mxu0 0
  %241 = vmatprep.subr.bf16.mxu0 0
  %242 = vmatpush1.bf16.msra.mxu0 0
  %243 = vmatprep.subr.bf16.mxu0 0
  %244 = vmatpush1.bf16.msra.mxu0 0
  %245 = vmatprep.subr.bf16.mxu0 0
  %246 = vmatpush1.bf16.msra.mxu0 0
  %247 = vmatprep.subr.bf16.mxu0 0
  %248 = vmatpush1.bf16.msra.mxu0 0
  %249 = vmatprep.subr.bf16.mxu0 0
  %250 = vmatpush1.bf16.msra.mxu0 0
  %251 = vmatprep.subr.bf16.mxu0 0
  %252 = vmatpush1.bf16.msra.mxu0 0
  %253 = vmatprep.subr.bf16.mxu0 0
  %254 = vmatpush1.bf16.msra.mxu0 0
  %255 = vmatprep.subr.bf16.mxu0 0
  %256 = vmatpush1.bf16.msra.mxu0 0
  %257 = vmatprep.subr.bf16.mxu0 0
  %258 = vmatpush1.bf16.msra.mxu0 0
  %259 = vmatprep.subr.bf16.mxu0 0
  %260 = vmatpush1.bf16.msra.mxu0 0
  %261 = vmatprep.mubr.bf16.mxu0 0
  %262 = vmatmul.mubr.bf16.gmra.mrb[0].mxu0 %v227
  %v263 = vpop.f32.mrb[0].mxu0
  %v264 = vadd.f32 %v211, %v263
  %v265 = vpop.f32.mrb[0].mxu0
  %v266 = vpop.f32.mrb[0].mxu0
  %v267 = vpop.f32.mrb[0].mxu0
  %268 = vdwg.mxu0
  %269 = vst [vmem:[%s7] sm:$0xff] %v264
  // Predicated region
  $region30: #{dqn_dense_forward.1} parent=0 // pred_check
    _
  $region31: #{dqn_dense_forward.1} parent=0 // pred_check_branch
    %271 = sbr.rel (0) target = $region33
  $region32: #{dqn_dense_forward.1} parent=0 // pred_region
    _
  $region33: #{dqn_dense_forward.1} parent=0 // pred_fallthru
    _
  // Predicated region
  $region34: #{dqn_dense_forward.1} parent=0 // pred_check
    _
  $region35: #{dqn_dense_forward.1} parent=0 // pred_check_branch
    %273 = sbr.rel (0) target = $region37
  $region36: #{dqn_dense_forward.1} parent=0 // pred_region
    _
  $region37: #{dqn_dense_forward.1} parent=0 // pred_fallthru
    _

</llo_original>
